<compile_context>
chip_gen: v5e
topology: v5e:2x2
jax: 0.10.0
libtpu: 0.0.40
codegen_flags: <defaults>
</compile_context>

<pallas_src>
import numpy as np
import jax
import jax.numpy as jnp
from jax import lax
from jax.experimental import pallas as pl
from jax.experimental.pallas import tpu as pltpu


_MAX_TM = 512      # user-tile cap (sublane axis)
_MAX_TN = 1024     # item-tile cap (lane axis, multiple of 128; v7x-safe)
_VPU_F_MAX = 32    # below this, do the contraction on the VPU in exact f32


def _round_up(x: int, m: int) -> int:
    return ((x + m - 1) // m) * m


def _choose_tile(n: int, align: int, max_tile: int):
    """Returns (tile, padded_total) with tile aligned and padded_total % tile == 0."""
    t = _round_up(n, align)
    if t <= max_tile:
        return t, t
    return max_tile, _round_up(n, max_tile)


def _mf_kernel(u_ref, it_ref, o_ref):
    """One (TM, TN) output tile: (TM, F) x (F, TN) -> (TM, TN), f32."""
    u = u_ref[...]          # (TM, F)  float32 gathered user factors
    vt = it_ref[...]        # (F, TN)  float32 gathered+transposed item factors
    f_dim = u.shape[1]
    if f_dim <= _VPU_F_MAX:
        # Tiny contraction dim: unrolled VPU multiply-add in exact f32
        # (matches PyTorch's f32 mm; the kernel is HBM/store bound anyway,
        # so the MXU would be ~idle here).
        acc = u[:, 0:1] * vt[0:1, :]
        for f_idx in range(1, f_dim):
            acc = acc + u[:, f_idx:f_idx + 1] * vt[f_idx:f_idx + 1, :]
        o_ref[...] = acc
    else:
        # Larger factor dims: MXU matmul with f32 accumulation.
        o_ref[...] = lax.dot_general(
            u, vt,
            dimension_numbers=(((1,), (0,)), ((), ())),
            preferred_element_type=jnp.float32,
        )


def matrix_factorization_forward(user_table, item_table, users, items):
    """Equivalent of MatrixFactorization.forward(users, items)."""
    user_table = jnp.asarray(user_table, jnp.float32)
    item_table = jnp.asarray(item_table, jnp.float32)
    users = jnp.asarray(users, jnp.int32)
    items = jnp.asarray(items, jnp.int32)

    (bu,) = users.shape
    (bi,) = items.shape
    n_users, f = user_table.shape
    n_items, f_i = item_table.shape
    assert f == f_i, "user/item factor dims must match"

    # Lane-dense output tiles; pad the batches up to the tiles.
    tm, bu_pad = _choose_tile(bu, 8, _MAX_TM)     # sublane-aligned user tile
    tn, bi_pad = _choose_tile(bi, 128, _MAX_TN)   # lane-dense item tile

    # Pad index batches with a valid index (0); padded rows are sliced away.
    users_p = jnp.zeros((bu_pad,), jnp.int32).at[:bu].set(users)
    items_p = jnp.zeros((bi_pad,), jnp.int32).at[:bi].set(items)

    # Gather hoisted to XLA (handles arbitrarily large HBM-resident tables),
    # item factors pre-transposed so the kernel needs no XLU transpose.
    u_g = jnp.take(user_table, users_p, axis=0)            # (bu_pad, F)
    it_g = jnp.take(item_table, items_p, axis=0).T         # (F, bi_pad)

    grid = (bu_pad // tm, bi_pad // tn)

    # VMEM budget from the actual (padded, double-buffered) block footprint,
    # with 2x headroom; capped well below v7x's 64-MiB physical VMEM.
    def _blk_bytes(r, c):
        return _round_up(r, 8) * _round_up(c, 128) * 4
    footprint = 2 * (_blk_bytes(tm, f) + _blk_bytes(f, tn) + _blk_bytes(tm, tn))
    vmem_limit = int(min(max(2 * footprint, 8 * 1024 * 1024), 48 * 1024 * 1024))

    out = pl.pallas_call(
        _mf_kernel,
        out_shape=jax.ShapeDtypeStruct((bu_pad, bi_pad), jnp.float32),
        grid=grid,
        in_specs=[
            pl.BlockSpec((tm, f), lambda i, j: (i, 0)),   # gathered user rows
            pl.BlockSpec((f, tn), lambda i, j: (0, j)),   # gathered item rows^T
        ],
        out_specs=pl.BlockSpec((tm, tn), lambda i, j: (i, j)),
        compiler_params=pltpu.CompilerParams(
            dimension_semantics=("parallel", "parallel"),
            vmem_limit_bytes=vmem_limit,
        ),
        cost_estimate=pl.CostEstimate(
            flops=2 * bu_pad * bi_pad * f,
            transcendentals=0,
            bytes_accessed=(bu_pad * f + f * bi_pad + bu_pad * bi_pad) * 4,
        ),
    )(u_g, it_g)

    return out[:bu, :bi]


if __name__ == "__main__":
    # Deterministic parameter init (nn.Embedding default: N(0, 1)).
    n_users, n_items, n_factors = 16, 12, 4
    key = jax.random.PRNGKey(0)
    k_u, k_i, k_uu, k_ii = jax.random.split(key, 4)
    user_table = jax.random.normal(k_u, (n_users, n_factors), dtype=jnp.float32)
    item_table = jax.random.normal(k_i, (n_items, n_factors), dtype=jnp.float32)

    # Batch of user / item indices (like LongTensor inputs in PyTorch).
    bu, bi = 8, 8
    users = jax.random.randint(k_uu, (bu,), 0, n_users, dtype=jnp.int32)
    items = jax.random.randint(k_ii, (bi,), 0, n_items, dtype=jnp.int32)

    out = matrix_factorization_forward(user_table, item_table, users, items)
    out = jax.block_until_ready(out)

    # References: full-f32 contraction, so tolerances can be tight.
    u = jnp.take(user_table, users, axis=0)
    v = jnp.take(item_table, items, axis=0)
    ref = u @ v.T
    ref_np = np.asarray(u, np.float64) @ np.asarray(v, np.float64).T

    assert out.shape == (bu, bi)
    assert jnp.allclose(out, ref, atol=1e-4, rtol=1e-4)
    assert np.allclose(np.asarray(out, np.float64), ref_np, atol=1e-4, rtol=1e-4)

    print("KERNEL_OK")
</pallas_src>

<mosaic_0001>
module attributes {stable_mosaic.version = 11 : i64} {
  func.func @_mf_kernel(%arg0: i32, %arg1: i32, %arg2: memref<8x4xf32, #tpu.memory_space<vmem>>, %arg3: memref<4x128xf32, #tpu.memory_space<vmem>>, %arg4: memref<8x128xf32, #tpu.memory_space<vmem>>) attributes {dimension_semantics = [#tpu.dimension_semantics<parallel>, #tpu.dimension_semantics<parallel>], iteration_bounds = array<i64: 1, 1>, scalar_prefetch = 0 : i64, scratch_operands = 0 : i64, tpu.core_type = #tpu.core_type<tc>, window_params = [{transform_indices = @transform_0, window_bounds = array<i64: 8, 4>}, {transform_indices = @transform_1, window_bounds = array<i64: 4, 128>}, {transform_indices = @transform_2, window_bounds = array<i64: 8, 128>}]} {
    %c0 = arith.constant 0 : index
    %c0_0 = arith.constant 0 : index
    %0 = vector.load %arg2[%c0, %c0_0] : memref<8x4xf32, #tpu.memory_space<vmem>>, vector<8x4xf32>
    %c0_1 = arith.constant 0 : index
    %c0_2 = arith.constant 0 : index
    %1 = vector.load %arg3[%c0_1, %c0_2] : memref<4x128xf32, #tpu.memory_space<vmem>>, vector<4x128xf32>
    %2 = vector.extract_strided_slice %0 {offsets = [0, 0], sizes = [8, 1], strides = [1, 1]} : vector<8x4xf32> to vector<8x1xf32>
    %3 = vector.extract_strided_slice %1 {offsets = [0, 0], sizes = [1, 128], strides = [1, 1]} : vector<4x128xf32> to vector<1x128xf32>
    %4 = vector.broadcast %2 : vector<8x1xf32> to vector<8x128xf32>
    %5 = vector.broadcast %3 : vector<1x128xf32> to vector<8x128xf32>
    %6 = arith.mulf %4, %5 : vector<8x128xf32>
    %7 = vector.extract_strided_slice %0 {offsets = [0, 1], sizes = [8, 1], strides = [1, 1]} : vector<8x4xf32> to vector<8x1xf32>
    %8 = vector.extract_strided_slice %1 {offsets = [1, 0], sizes = [1, 128], strides = [1, 1]} : vector<4x128xf32> to vector<1x128xf32>
    %9 = vector.broadcast %7 : vector<8x1xf32> to vector<8x128xf32>
    %10 = vector.broadcast %8 : vector<1x128xf32> to vector<8x128xf32>
    %11 = arith.mulf %9, %10 : vector<8x128xf32>
    %12 = arith.addf %6, %11 : vector<8x128xf32>
    %13 = vector.extract_strided_slice %0 {offsets = [0, 2], sizes = [8, 1], strides = [1, 1]} : vector<8x4xf32> to vector<8x1xf32>
    %14 = vector.extract_strided_slice %1 {offsets = [2, 0], sizes = [1, 128], strides = [1, 1]} : vector<4x128xf32> to vector<1x128xf32>
    %15 = vector.broadcast %13 : vector<8x1xf32> to vector<8x128xf32>
    %16 = vector.broadcast %14 : vector<1x128xf32> to vector<8x128xf32>
    %17 = arith.mulf %15, %16 : vector<8x128xf32>
    %18 = arith.addf %12, %17 : vector<8x128xf32>
    %19 = vector.extract_strided_slice %0 {offsets = [0, 3], sizes = [8, 1], strides = [1, 1]} : vector<8x4xf32> to vector<8x1xf32>
    %20 = vector.extract_strided_slice %1 {offsets = [3, 0], sizes = [1, 128], strides = [1, 1]} : vector<4x128xf32> to vector<1x128xf32>
    %21 = vector.broadcast %19 : vector<8x1xf32> to vector<8x128xf32>
    %22 = vector.broadcast %20 : vector<1x128xf32> to vector<8x128xf32>
    %23 = arith.mulf %21, %22 : vector<8x128xf32>
    %24 = arith.addf %18, %23 : vector<8x128xf32>
    %c0_3 = arith.constant 0 : index
    %c0_4 = arith.constant 0 : index
    %25 = vector.load %arg4[%c0_3, %c0_4] : memref<8x128xf32, #tpu.memory_space<vmem>>, vector<8x128xf32>
    tpu.vector_store %arg4[%c0_3, %c0_4], %24 {strides = array<i32>} : memref<8x128xf32, #tpu.memory_space<vmem>>, vector<8x128xf32>,
    return
  }
  func.func @transform_0(%arg0: i32, %arg1: i32) -> (i32, i32) {
    %c0_i32 = arith.constant 0 : i32
    %c0_i32_0 = arith.constant 0 : i32
    return %arg0, %c0_i32 : i32, i32
  }
  func.func @transform_1(%arg0: i32, %arg1: i32) -> (i32, i32) {
    %c0_i32 = arith.constant 0 : i32
    %c0_i32_0 = arith.constant 0 : i32
    return %c0_i32, %arg1 : i32, i32
  }
  func.func @transform_2(%arg0: i32, %arg1: i32) -> (i32, i32) {
    %c0_i32 = arith.constant 0 : i32
    return %arg0, %arg1 : i32, i32
  }
}

</mosaic_0001>

<llo_original>
// kernel: tpu_custom_call.1
$region0: #{tpu_custom_call.1}
  #allocation0 [shape = 'u32[]', space=smem, size = 0x4, offset = 0x4, fixed_abs, tag = 'smem constant byte address 0x4 - core index']
  #allocation1 [shape = 'u32[72,128]{1,0:T(1,128)}', space=vmem, size = 0x9000, scoped, tag = 'internal scratch']
  %s0 = inlined_call_operand.vmem [shape: f32[8,4], index: 0, kind: input, shape index: {}]
  %s1 = inlined_call_operand.vmem [shape: f32[4,128], index: 1, kind: input, shape index: {}]
  %s2 = inlined_call_operand.hbm [shape: f32[8,128], index: 2, kind: output, shape index: {}]
  %s3 = sld [smem:[#allocation0]]
  $region18: #{tpu_custom_call.1} parent=0
    _
  %s5 = ssub.s32 1, %s3
  %s6 = scalar_select 0, %s5, %s3
  $region1: #{tpu_custom_call.1} parent=0
    #allocation2 [shape = 'u8[4096]{0}', space=vmem, size = 0x1000, scoped, tag = 'output window, operand 0, single buffered']
    #allocation3 [shape = 's32[1]{0}', space=sflag, size = 0x4, scoped, tag = 'scoped memory for tpu_custom_call.1']
    %7 = vsyncpa [#allocation3], 0
    // Predicated region
    $region2: #{tpu_custom_call.1} parent=1 // pred_check
      _
    $region3: #{tpu_custom_call.1} parent=1 // pred_check_branch
      %9 = sbr.rel (0) target = $region5
    $region4: #{tpu_custom_call.1} parent=1 // pred_region
      _
    $region5: #{tpu_custom_call.1} parent=1 // pred_fallthru
      _
    // Predicated region
    $region6: #{tpu_custom_call.1} parent=1 // pred_check
      _
    $region7: #{tpu_custom_call.1} parent=1 // pred_check_branch
      %11 = sbr.rel (0) target = $region9
    $region8: #{tpu_custom_call.1} parent=1 // pred_region
      _
    $region9: #{tpu_custom_call.1} parent=1 // pred_fallthru
      _
    %v12 = vld [vmem:[%s0] sm:$0xff]
    %v13 = vld [vmem:[%s1] sm:$0xf]
    %15 = vset.pattern.permute.xlu0 0
    %16 = vperm.xlu0 %15, %v12
    %v17 = vpop.permute.xlu0 %16
    %v19 = vperm.slane %v13, 0
    %v20 = vmul.f32 %v17, %v19
    %21 = vset.pattern.permute.xlu0 1
    %22 = vperm.xlu0 %21, %v12
    %v23 = vpop.permute.xlu0 %22
    %v25 = vperm.slane %v13, 1
    %v26 = vmul.f32 %v23, %v25
    %v27 = vadd.f32 %v20, %v26
    %28 = vset.pattern.permute.xlu0 2
    %29 = vperm.xlu0 %28, %v12
    %v30 = vpop.permute.xlu0 %29
    %v32 = vperm.slane %v13, 2
    %v33 = vmul.f32 %v30, %v32
    %v34 = vadd.f32 %v27, %v33
    %35 = vset.pattern.permute.xlu0 3
    %36 = vperm.xlu0 %35, %v12
    %v37 = vpop.permute.xlu0 %36
    %v39 = vperm.slane %v13, 3
    %v40 = vmul.f32 %v37, %v39
    %v41 = vadd.f32 %v34, %v40
    %42 = vst [vmem:[#allocation2] sm:$0xff] %v41
    // Predicated region
    $region10: #{tpu_custom_call.1} parent=1 // pred_check
      _
    $region11: #{tpu_custom_call.1} parent=1 // pred_check_branch
      %44 = sbr.rel (0) target = $region13
    $region12: #{tpu_custom_call.1} parent=1 // pred_region
      %46 = vsyncadd [#allocation3], 0
      %s48 = sshll.u32 [#allocation2], 4
      %s49 = int_to_ptr.vmem [resolvable:$true] %s48
      %s50 = sshll.u32 %s2, 4
      %s51 = int_to_ptr.hbm [resolvable:$true] %s50
      %53 = dma.vmem_to_hbm [thread:$0]  %s49, 128, %s51, [#allocation3]
    $region13: #{tpu_custom_call.1} parent=1 // pred_fallthru
      _
    // Predicated region
    $region14: #{tpu_custom_call.1} parent=1 // pred_check
      _
    $region15: #{tpu_custom_call.1} parent=1 // pred_check_branch
      %55 = sbr.rel (0) target = $region17
    $region16: #{tpu_custom_call.1} parent=1 // pred_region
      %57 = dma.done [#allocation3], 128
    $region17: #{tpu_custom_call.1} parent=1 // pred_fallthru
      _
    %58 = vsyncpa [#allocation3], 1

</llo_original>
